<compile_context>
chip_gen: v7x
topology: tpu7x:2x2x1
jax: 0.10.0
libtpu: 0.0.40
codegen_flags: <defaults>
</compile_context>

<pallas_src>
import functools

import jax
import jax.numpy as jnp
from jax.experimental import pallas as pl
from jax.experimental.pallas import tpu as pltpu

_LANES = 128
_TARGET_BLOCK_BYTES = 2 * 1024 * 1024  # ~2 MiB per block: safe on v5e/v6e/v7x


@functools.lru_cache(maxsize=None)
def _make_scale_kernel(drop):
    """Kernel with the compile-time-constant `drop` baked in (no SMEM scalar)."""

    def kernel(g_ref, o_ref):
        o_ref[...] = g_ref[...] * jnp.asarray(drop, dtype=g_ref.dtype)

    return kernel


def _pallas_scale(g, drop):
    """Compute g * drop with a lane-dense, ~2 MiB-blocked Pallas kernel."""
    orig_shape, dtype = g.shape, g.dtype
    n = g.size
    itemsize = jnp.dtype(dtype).itemsize

    # Dtype-aware minimum sublane rows: 8 for 4-byte, 16 for 2-byte, 32 for 1-byte.
    min_rows = {4: 8, 2: 16, 1: 32}.get(itemsize, 8)

    rows = pl.cdiv(n, _LANES)

    # ~2 MiB blocks, rounded to a multiple of the packed-sublane requirement.
    target_rows = max(min_rows, _TARGET_BLOCK_BYTES // (_LANES * itemsize))
    target_rows = max(min_rows, (target_rows // min_rows) * min_rows)
    tile_rows = min(target_rows, pl.cdiv(rows, min_rows) * min_rows)

    # Pad the flattened array to a whole number of (tile_rows, 128) tiles so
    # every block is full-size and dense (no whole-array fallback, no tiny tiles).
    padded_rows = pl.cdiv(rows, tile_rows) * tile_rows
    padded_n = padded_rows * _LANES

    flat = g.reshape(-1)
    if padded_n != n:
        flat = jnp.pad(flat, (0, padded_n - n))
    g2d = flat.reshape(padded_rows, _LANES)

    out2d = pl.pallas_call(
        _make_scale_kernel(float(drop)),
        out_shape=jax.ShapeDtypeStruct((padded_rows, _LANES), dtype),
        grid_spec=pltpu.PrefetchScalarGridSpec(
            num_scalar_prefetch=0,
            grid=(padded_rows // tile_rows,),
            in_specs=[pl.BlockSpec((tile_rows, _LANES), lambda i: (i, 0))],
            out_specs=pl.BlockSpec((tile_rows, _LANES), lambda i: (i, 0)),
        ),
        compiler_params=pltpu.CompilerParams(
            # Keep the grid axis parallel so megacore parts (v7x: 2 TCs) can
            # shard this purely bandwidth-bound loop across cores.
            dimension_semantics=("parallel",)),
    )(g2d)

    out = out2d.reshape(-1)
    if padded_n != n:
        out = out[:n]
    return out.reshape(orig_shape)


@functools.partial(jax.custom_vjp, nondiff_argnums=(1,))
def drop_grad(x, drop):
    # Forward of DropGrad_AF is x.clone(); with immutable JAX arrays identity
    # is exactly equivalent and costs zero HBM traffic (no copy kernel).
    return x


def _drop_grad_fwd(x, drop):
    return x, None


def _drop_grad_bwd(drop, _, g):
    drop = float(drop)
    if drop == 0.0:
        # Gradient is dropped: write-only zero fill, never reads g.
        return (jnp.zeros_like(g),)
    if drop == 1.0:
        # Gradient passes through untouched: zero HBM traffic.
        return (g,)
    # Fractional drop: Pallas scale kernel with `drop` baked in.
    return (_pallas_scale(g, drop),)


drop_grad.defvjp(_drop_grad_fwd, _drop_grad_bwd)


class DropGrad:
    """JAX/Pallas equivalent of the PyTorch DropGrad module."""

    def __init__(self, drop=True):
        # PyTorch: self.drop = 0 if drop else 1
        self.drop = 0.0 if drop else 1.0

    def __call__(self, x):
        return drop_grad(x, self.drop)


if __name__ == "__main__":
    key = jax.random.PRNGKey(0)
    # NCHW input, small shapes: batch=2, channels=4, spatial=16x16
    x = jax.random.normal(key, (2, 4, 16, 16), dtype=jnp.float32)

    # --- module semantics (drop in {0, 1}: no kernel launch needed) ---------
    mod = DropGrad(drop=True)
    y = jax.block_until_ready(mod(x))
    assert y.shape == x.shape and y.dtype == x.dtype
    assert bool(jnp.all(y == x))                      # forward is an exact copy

    g = jax.block_until_ready(jax.grad(lambda v: jnp.sum(mod(v)))(x))
    assert bool(jnp.all(g == 0.0))                    # drop=True -> grad zeroed

    mod2 = DropGrad(drop=False)
    g2 = jax.block_until_ready(jax.grad(lambda v: jnp.sum(mod2(v)))(x))
    assert bool(jnp.all(g2 == 1.0))                   # drop=False -> pass-through

    # --- fractional drop: exercises the Pallas scale kernel -----------------
    g_half = jax.block_until_ready(
        jax.grad(lambda v: jnp.sum(drop_grad(v, 0.5)))(x))
    assert bool(jnp.allclose(g_half, 0.5))

    # Direct kernel call on an awkward (non-128-divisible) shape -> padding path.
    x_odd = jax.random.normal(jax.random.PRNGKey(1), (3, 5, 7), dtype=jnp.float32)
    y_odd = jax.block_until_ready(_pallas_scale(x_odd, 0.25))
    assert bool(jnp.allclose(y_odd, x_odd * 0.25))

    # Packed-dtype path (bf16 -> 16-row sublane tiles).
    x_bf = x.astype(jnp.bfloat16)
    y_bf = jax.block_until_ready(_pallas_scale(x_bf, 0.5))
    assert bool(jnp.allclose(y_bf.astype(jnp.float32),
                             x_bf.astype(jnp.float32) * 0.5))

    print("KERNEL_OK")
</pallas_src>

<mosaic_0001>
module attributes {stable_mosaic.version = 11 : i64} {
  func.func @kernel(%arg0: i32, %arg1: memref<16x128xf32, #tpu.memory_space<vmem>>, %arg2: memref<16x128xf32, #tpu.memory_space<vmem>>) attributes {dimension_semantics = [#tpu.dimension_semantics<parallel>], iteration_bounds = array<i64: 1>, scalar_prefetch = 0 : i64, scratch_operands = 0 : i64, tpu.core_type = #tpu.core_type<tc>, window_params = [{transform_indices = @transform_0, window_bounds = array<i64: 16, 128>}, {transform_indices = @transform_1, window_bounds = array<i64: 16, 128>}]} {
    %c0 = arith.constant 0 : index
    %c0_0 = arith.constant 0 : index
    %0 = vector.load %arg1[%c0, %c0_0] : memref<16x128xf32, #tpu.memory_space<vmem>>, vector<16x128xf32>
    %cst = arith.constant 5.000000e-01 : f32
    %1 = vector.broadcast %cst : f32 to vector<16x128xf32>
    %2 = arith.mulf %0, %1 : vector<16x128xf32>
    %c0_1 = arith.constant 0 : index
    %c0_2 = arith.constant 0 : index
    %3 = vector.load %arg2[%c0_1, %c0_2] : memref<16x128xf32, #tpu.memory_space<vmem>>, vector<16x128xf32>
    tpu.vector_store %arg2[%c0_1, %c0_2], %2 {strides = array<i32>} : memref<16x128xf32, #tpu.memory_space<vmem>>, vector<16x128xf32>,
    return
  }
  func.func @transform_0(%arg0: i32) -> (i32, i32) {
    %c0_i32 = arith.constant 0 : i32
    %c0_i32_0 = arith.constant 0 : i32
    return %arg0, %c0_i32 : i32, i32
  }
  func.func @transform_1(%arg0: i32) -> (i32, i32) {
    %c0_i32 = arith.constant 0 : i32
    %c0_i32_0 = arith.constant 0 : i32
    return %arg0, %c0_i32 : i32, i32
  }
}

</mosaic_0001>

<llo_original>
// kernel: tpu_custom_call.1
$region0: #{tpu_custom_call.1}
  #allocation0 [shape = 'u32[]', space=smem, size = 0x4, offset = 0x4, fixed_abs, tag = 'smem constant byte address 0x4 - core index']
  #allocation1 [shape = 'u32[144,128]{1,0:T(1,128)}', space=vmem, size = 0x12000, scoped, tag = 'internal scratch']
  %s0 = inlined_call_operand.hbm [shape: f32[16,128], index: 0, kind: input, shape index: {}]
  %s1 = inlined_call_operand.hbm [shape: f32[16,128], index: 1, kind: output, shape index: {}]
  %s2 = sld [smem:[#allocation0]]
  $region18: #{tpu_custom_call.1} parent=0
    _
  %s4 = ssub.s32 1, %s2
  %s5 = scalar_select 0, %s4, %s2
  $region1: #{tpu_custom_call.1} parent=0
    #allocation2 [shape = 'u8[8192]{0}', space=vmem, size = 0x2000, scoped, tag = 'input window, operand 0, single buffered']
    #allocation3 [shape = 's32[1]{0}', space=sflag, size = 0x4, scoped, tag = 'scoped memory for tpu_custom_call.1']
    #allocation4 [shape = 's32[1]{0}', space=sflag, size = 0x4, scoped, tag = 'scoped memory for tpu_custom_call.1']
    #allocation5 [shape = 'u8[8192]{0}', space=vmem, size = 0x2000, scoped, tag = 'output window, operand 0, single buffered']
    %6 = vsyncpa [#allocation3], 0
    %7 = vsyncpa [#allocation4], 0
    // Predicated region
    $region2: #{tpu_custom_call.1} parent=1 // pred_check
      _
    $region3: #{tpu_custom_call.1} parent=1 // pred_check_branch
      %9 = sbr.rel (0) target = $region5
    $region4: #{tpu_custom_call.1} parent=1 // pred_region
      %s11 = ssub.s32 256, 256
      %12 = vsyncadd [#allocation3], %s11
      %s13 = sshll.u32 [#allocation2], 4
      %s14 = int_to_ptr.vmem [resolvable:$true] %s13
      %19 = dma.hbm_to_vmem [thread:$0]  %s0, 256, %s14, [#allocation3], 128, 128, 8
    $region5: #{tpu_custom_call.1} parent=1 // pred_fallthru
      _
    // Predicated region
    $region6: #{tpu_custom_call.1} parent=1 // pred_check
      _
    $region7: #{tpu_custom_call.1} parent=1 // pred_check_branch
      %21 = sbr.rel (0) target = $region9
    $region8: #{tpu_custom_call.1} parent=1 // pred_region
      %22 = dma.done [#allocation3], 256
    $region9: #{tpu_custom_call.1} parent=1 // pred_fallthru
      _
    %v23 = vld [vmem:[#allocation2] sm:$0xff]
    %v24 = vld [vmem:[#allocation2 + $0x8] sm:$0xff]
    %v25 = vmul.f32 %v23, 0.5
    %v26 = vmul.f32 %v24, 0.5
    %27 = vst [vmem:[#allocation5] sm:$0xff] %v25
    %28 = vst [vmem:[#allocation5 + $0x8] sm:$0xff] %v26
    // Predicated region
    $region10: #{tpu_custom_call.1} parent=1 // pred_check
      _
    $region11: #{tpu_custom_call.1} parent=1 // pred_check_branch
      %30 = sbr.rel (0) target = $region13
    $region12: #{tpu_custom_call.1} parent=1 // pred_region
      %s32 = ssub.s32 256, 256
      %33 = vsyncadd [#allocation4], %s32
      %s34 = sshll.u32 [#allocation5], 4
      %s35 = int_to_ptr.vmem [resolvable:$true] %s34
      %40 = dma.vmem_to_hbm [thread:$0]  %s35, 256, %s1, [#allocation4], 128, 128, 8
    $region13: #{tpu_custom_call.1} parent=1 // pred_fallthru
      _
    // Predicated region
    $region14: #{tpu_custom_call.1} parent=1 // pred_check
      _
    $region15: #{tpu_custom_call.1} parent=1 // pred_check_branch
      %42 = sbr.rel (0) target = $region17
    $region16: #{tpu_custom_call.1} parent=1 // pred_region
      %43 = dma.done [#allocation4], 256
    $region17: #{tpu_custom_call.1} parent=1 // pred_fallthru
      _
    %44 = vsyncpa [#allocation3], 1
    %45 = vsyncpa [#allocation4], 1

</llo_original>
